<compile_context>
chip_gen: v5e
topology: v5e:2x2
jax: 0.10.0
libtpu: 0.0.40
codegen_flags: <defaults>
</compile_context>

<pallas_src>
import functools

import jax
import jax.numpy as jnp
from jax import lax
from jax.experimental import pallas as pl
from jax.experimental.pallas import tpu as pltpu


# Hidden layer sizes from the PyTorch module definition.
HIDDEN_DIMS = (256, 160, 32, 128, 64, 256)
LANE = 128  # pad every feature dim to a multiple of the lane width


def _round_up(n, m):
    return ((n + m - 1) // m) * m


def _mlp_kernel(num_classes, bias_slices, x_ref,
                w1, w2, w3, w4, w5, w6, w7, bias_ref, out_ref):
    """Forward pass for one batch tile, entirely in VMEM.

    x_ref:    (bm, F_pad)        bfloat16
    w_i:      (in_pad, out_pad)  bfloat16  (zero-padded, pre-transposed)
    bias_ref: (1, sum(out_pad))  float32   (all biases packed, zero-padded)
    out_ref:  (bm, C_pad)        float32   softmax probs (padded cols are 0)
    """
    w_refs = (w1, w2, w3, w4, w5, w6, w7)

    def dense(h, layer):
        start, width = bias_slices[layer]          # static offsets, 128-aligned
        b = bias_ref[:, start:start + width]       # (1, width) f32
        y = jnp.dot(h.astype(jnp.bfloat16), w_refs[layer][...],
                    preferred_element_type=jnp.float32)
        return y + b

    h = x_ref[...]
    for layer in range(6):                          # layer1..layer6: Linear+ReLU
        h = jnp.maximum(dense(h, layer), 0.0)

    # layer7: Linear + Softmax(dim=1), numerically stable; mask padded classes.
    logits = dense(h, 6)                            # (bm, C_pad) f32
    col = lax.broadcasted_iota(jnp.int32, logits.shape, 1)
    logits = jnp.where(col < num_classes, logits, jnp.float32(-1e30))
    m = jnp.max(logits, axis=-1, keepdims=True)
    e = jnp.exp(logits - m)
    denom = jnp.sum(e, axis=-1, keepdims=True)
    out_ref[...] = e * pl.reciprocal(denom, approx=True)


@functools.partial(jax.jit, static_argnames=("block_rows",))
def mlp_forward(x, params, block_rows=512):
    """params: list of (W, b) with W shaped (in, out), b shaped (1, out)."""
    B, F = x.shape
    num_classes = params[-1][0].shape[1]

    dims = [F] + [w.shape[1] for w, _ in params]
    pdims = [_round_up(d, LANE) for d in dims]

    # Pad + cast weights to bf16; pack all padded biases into one f32 array.
    w_padded = []
    bias_chunks = []
    bias_slices = []
    off = 0
    for i, (w, b) in enumerate(params):
        pin, pout = pdims[i], pdims[i + 1]
        wp = jnp.pad(w, ((0, pin - w.shape[0]), (0, pout - w.shape[1])))
        w_padded.append(wp.astype(jnp.bfloat16))
        bp = jnp.pad(b.reshape(1, -1), ((0, 0), (0, pout - b.shape[-1])))
        bias_chunks.append(bp.astype(jnp.float32))
        bias_slices.append((off, pout))
        off += pout
    bias_packed = jnp.concatenate(bias_chunks, axis=1)   # (1, 1280) f32

    # Pad + cast the input; tile the batch (sublane-aligned row count).
    F_pad, C_pad = pdims[0], pdims[-1]
    bm = min(block_rows, _round_up(B, 8))
    B_pad = _round_up(B, bm)
    xp = jnp.pad(x, ((0, B_pad - B), (0, F_pad - F))).astype(jnp.bfloat16)

    grid = (B_pad // bm,)

    def const_spec(shape):
        # Constant block index -> fetched once, VMEM-resident across grid steps.
        return pl.BlockSpec(shape, lambda i: (0,) * len(shape))

    kernel = functools.partial(_mlp_kernel, num_classes, tuple(bias_slices))

    out = pl.pallas_call(
        kernel,
        out_shape=jax.ShapeDtypeStruct((B_pad, C_pad), jnp.float32),
        grid=grid,
        in_specs=[pl.BlockSpec((bm, F_pad), lambda i: (i, 0))]
                 + [const_spec(w.shape) for w in w_padded]
                 + [const_spec(bias_packed.shape)],
        out_specs=pl.BlockSpec((bm, C_pad), lambda i: (i, 0)),
        compiler_params=pltpu.CompilerParams(
            dimension_semantics=("parallel",)),
    )(xp, *w_padded, bias_packed)

    return out[:B, :num_classes]


def init_params(key, number_of_features, number_of_classes):
    """Deterministic init mimicking torch.nn.Linear (uniform in +-1/sqrt(fan_in))."""
    dims = (number_of_features,) + HIDDEN_DIMS + (number_of_classes,)
    params = []
    for i in range(len(dims) - 1):
        fan_in, fan_out = dims[i], dims[i + 1]
        key, kw, kb = jax.random.split(key, 3)
        bound = 1.0 / jnp.sqrt(jnp.float32(fan_in))
        # Stored directly as (in, out): equivalent to torch weight (out, in) transposed.
        w = jax.random.uniform(kw, (fan_in, fan_out), jnp.float32, -bound, bound)
        b = jax.random.uniform(kb, (1, fan_out), jnp.float32, -bound, bound)
        params.append((w, b))
    return params


def reference_forward(x, params):
    """Pure-JAX reference using the same bf16-in / f32-accumulate math."""
    h = x
    for w, b in params[:-1]:
        y = jnp.dot(h.astype(jnp.bfloat16), w.astype(jnp.bfloat16),
                    preferred_element_type=jnp.float32) + b
        h = jnp.maximum(y, 0.0)
    w, b = params[-1]
    logits = jnp.dot(h.astype(jnp.bfloat16), w.astype(jnp.bfloat16),
                     preferred_element_type=jnp.float32) + b
    return jax.nn.softmax(logits, axis=1)


if __name__ == "__main__":
    number_of_features = 32
    number_of_classes = 10
    batch = 8

    key = jax.random.PRNGKey(0)
    key, kx = jax.random.split(key)
    x = jax.random.normal(kx, (batch, number_of_features), jnp.float32)
    params = init_params(key, number_of_features, number_of_classes)

    out = mlp_forward(x, params)
    out = jax.block_until_ready(out)

    ref = reference_forward(x, params)
    assert out.shape == (batch, number_of_classes)
    # bf16 matmuls + approx reciprocal -> compare with a modest tolerance.
    assert jnp.allclose(out, ref, atol=5e-3, rtol=0), float(jnp.max(jnp.abs(out - ref)))
    assert jnp.allclose(jnp.sum(out, axis=1), 1.0, atol=5e-3)

    print("KERNEL_OK")
</pallas_src>

<mosaic_0001>
module attributes {stable_mosaic.version = 11 : i64} {
  func.func @_mlp_kernel(%arg0: i32, %arg1: memref<8x128xbf16, #tpu.memory_space<vmem>>, %arg2: memref<128x256xbf16, #tpu.memory_space<vmem>>, %arg3: memref<256x256xbf16, #tpu.memory_space<vmem>>, %arg4: memref<256x128xbf16, #tpu.memory_space<vmem>>, %arg5: memref<128x128xbf16, #tpu.memory_space<vmem>>, %arg6: memref<128x128xbf16, #tpu.memory_space<vmem>>, %arg7: memref<128x256xbf16, #tpu.memory_space<vmem>>, %arg8: memref<256x128xbf16, #tpu.memory_space<vmem>>, %arg9: memref<1x1280xf32, #tpu.memory_space<vmem>>, %arg10: memref<8x128xf32, #tpu.memory_space<vmem>>) attributes {dimension_semantics = [#tpu.dimension_semantics<parallel>], iteration_bounds = array<i64: 1>, scalar_prefetch = 0 : i64, scratch_operands = 0 : i64, tpu.core_type = #tpu.core_type<tc>, window_params = [{transform_indices = @transform_0, window_bounds = array<i64: 8, 128>}, {pipeline_mode = #tpu.pipeline_mode<synchronous>, transform_indices = @transform_1, window_bounds = array<i64: 128, 256>}, {pipeline_mode = #tpu.pipeline_mode<synchronous>, transform_indices = @transform_2, window_bounds = array<i64: 256, 256>}, {pipeline_mode = #tpu.pipeline_mode<synchronous>, transform_indices = @transform_3, window_bounds = array<i64: 256, 128>}, {pipeline_mode = #tpu.pipeline_mode<synchronous>, transform_indices = @transform_4, window_bounds = array<i64: 128, 128>}, {pipeline_mode = #tpu.pipeline_mode<synchronous>, transform_indices = @transform_5, window_bounds = array<i64: 128, 128>}, {pipeline_mode = #tpu.pipeline_mode<synchronous>, transform_indices = @transform_6, window_bounds = array<i64: 128, 256>}, {pipeline_mode = #tpu.pipeline_mode<synchronous>, transform_indices = @transform_7, window_bounds = array<i64: 256, 128>}, {pipeline_mode = #tpu.pipeline_mode<synchronous>, transform_indices = @transform_8, window_bounds = array<i64: 1, 1280>}, {transform_indices = @transform_9, window_bounds = array<i64: 8, 128>}]} {
    %c0 = arith.constant 0 : index
    %c0_0 = arith.constant 0 : index
    %0 = vector.load %arg1[%c0, %c0_0] : memref<8x128xbf16, #tpu.memory_space<vmem>>, vector<8x128xbf16>
    %c0_1 = arith.constant 0 : index
    %c0_2 = arith.constant 0 : index
    %1 = vector.load %arg9[%c0_1, %c0_2] : memref<1x1280xf32, #tpu.memory_space<vmem>>, vector<1x256xf32>
    %c0_3 = arith.constant 0 : index
    %c0_4 = arith.constant 0 : index
    %2 = vector.load %arg2[%c0_3, %c0_4] : memref<128x256xbf16, #tpu.memory_space<vmem>>, vector<128x256xbf16>
    %cst = arith.constant dense<0.000000e+00> : vector<8x256xf32>
    %3 = tpu.matmul %0, %2, %cst {dimension_numbers = #tpu.dot_dimension_numbers<[1], [0], [0], [1], [0, 0, 1, 1], [], []>} : vector<8x128xbf16>, vector<128x256xbf16>, vector<8x256xf32> -> vector<8x256xf32>
    %4 = vector.broadcast %1 : vector<1x256xf32> to vector<8x256xf32>
    %5 = arith.addf %3, %4 : vector<8x256xf32>
    %cst_5 = arith.constant 0.000000e+00 : f32
    %6 = vector.broadcast %cst_5 : f32 to vector<8x256xf32>
    %7 = arith.maximumf %5, %6 : vector<8x256xf32>
    %c0_6 = arith.constant 0 : index
    %c256 = arith.constant 256 : index
    %8 = vector.load %arg9[%c0_6, %c256] : memref<1x1280xf32, #tpu.memory_space<vmem>>, vector<1x256xf32>
    %9 = arith.truncf %7 : vector<8x256xf32> to vector<8x256xbf16>
    %c0_7 = arith.constant 0 : index
    %c0_8 = arith.constant 0 : index
    %10 = vector.load %arg3[%c0_7, %c0_8] : memref<256x256xbf16, #tpu.memory_space<vmem>>, vector<256x256xbf16>
    %cst_9 = arith.constant dense<0.000000e+00> : vector<8x256xf32>
    %11 = tpu.matmul %9, %10, %cst_9 {dimension_numbers = #tpu.dot_dimension_numbers<[1], [0], [0], [1], [0, 0, 1, 1], [], []>} : vector<8x256xbf16>, vector<256x256xbf16>, vector<8x256xf32> -> vector<8x256xf32>
    %12 = vector.broadcast %8 : vector<1x256xf32> to vector<8x256xf32>
    %13 = arith.addf %11, %12 : vector<8x256xf32>
    %cst_10 = arith.constant 0.000000e+00 : f32
    %14 = vector.broadcast %cst_10 : f32 to vector<8x256xf32>
    %15 = arith.maximumf %13, %14 : vector<8x256xf32>
    %c0_11 = arith.constant 0 : index
    %c512 = arith.constant 512 : index
    %16 = vector.load %arg9[%c0_11, %c512] : memref<1x1280xf32, #tpu.memory_space<vmem>>, vector<1x128xf32>
    %17 = arith.truncf %15 : vector<8x256xf32> to vector<8x256xbf16>
    %c0_12 = arith.constant 0 : index
    %c0_13 = arith.constant 0 : index
    %18 = vector.load %arg4[%c0_12, %c0_13] : memref<256x128xbf16, #tpu.memory_space<vmem>>, vector<256x128xbf16>
    %cst_14 = arith.constant dense<0.000000e+00> : vector<8x128xf32>
    %19 = tpu.matmul %17, %18, %cst_14 {dimension_numbers = #tpu.dot_dimension_numbers<[1], [0], [0], [1], [0, 0, 1, 1], [], []>} : vector<8x256xbf16>, vector<256x128xbf16>, vector<8x128xf32> -> vector<8x128xf32>
    %20 = vector.broadcast %16 : vector<1x128xf32> to vector<8x128xf32>
    %21 = arith.addf %19, %20 : vector<8x128xf32>
    %cst_15 = arith.constant 0.000000e+00 : f32
    %22 = vector.broadcast %cst_15 : f32 to vector<8x128xf32>
    %23 = arith.maximumf %21, %22 : vector<8x128xf32>
    %c0_16 = arith.constant 0 : index
    %c640 = arith.constant 640 : index
    %24 = vector.load %arg9[%c0_16, %c640] : memref<1x1280xf32, #tpu.memory_space<vmem>>, vector<1x128xf32>
    %25 = arith.truncf %23 : vector<8x128xf32> to vector<8x128xbf16>
    %c0_17 = arith.constant 0 : index
    %c0_18 = arith.constant 0 : index
    %26 = vector.load %arg5[%c0_17, %c0_18] : memref<128x128xbf16, #tpu.memory_space<vmem>>, vector<128x128xbf16>
    %cst_19 = arith.constant dense<0.000000e+00> : vector<8x128xf32>
    %27 = tpu.matmul %25, %26, %cst_19 {dimension_numbers = #tpu.dot_dimension_numbers<[1], [0], [0], [1], [0, 0, 1, 1], [], []>} : vector<8x128xbf16>, vector<128x128xbf16>, vector<8x128xf32> -> vector<8x128xf32>
    %28 = vector.broadcast %24 : vector<1x128xf32> to vector<8x128xf32>
    %29 = arith.addf %27, %28 : vector<8x128xf32>
    %cst_20 = arith.constant 0.000000e+00 : f32
    %30 = vector.broadcast %cst_20 : f32 to vector<8x128xf32>
    %31 = arith.maximumf %29, %30 : vector<8x128xf32>
    %c0_21 = arith.constant 0 : index
    %c768 = arith.constant 768 : index
    %32 = vector.load %arg9[%c0_21, %c768] : memref<1x1280xf32, #tpu.memory_space<vmem>>, vector<1x128xf32>
    %33 = arith.truncf %31 : vector<8x128xf32> to vector<8x128xbf16>
    %c0_22 = arith.constant 0 : index
    %c0_23 = arith.constant 0 : index
    %34 = vector.load %arg6[%c0_22, %c0_23] : memref<128x128xbf16, #tpu.memory_space<vmem>>, vector<128x128xbf16>
    %cst_24 = arith.constant dense<0.000000e+00> : vector<8x128xf32>
    %35 = tpu.matmul %33, %34, %cst_24 {dimension_numbers = #tpu.dot_dimension_numbers<[1], [0], [0], [1], [0, 0, 1, 1], [], []>} : vector<8x128xbf16>, vector<128x128xbf16>, vector<8x128xf32> -> vector<8x128xf32>
    %36 = vector.broadcast %32 : vector<1x128xf32> to vector<8x128xf32>
    %37 = arith.addf %35, %36 : vector<8x128xf32>
    %cst_25 = arith.constant 0.000000e+00 : f32
    %38 = vector.broadcast %cst_25 : f32 to vector<8x128xf32>
    %39 = arith.maximumf %37, %38 : vector<8x128xf32>
    %c0_26 = arith.constant 0 : index
    %c896 = arith.constant 896 : index
    %40 = vector.load %arg9[%c0_26, %c896] : memref<1x1280xf32, #tpu.memory_space<vmem>>, vector<1x256xf32>
    %41 = arith.truncf %39 : vector<8x128xf32> to vector<8x128xbf16>
    %c0_27 = arith.constant 0 : index
    %c0_28 = arith.constant 0 : index
    %42 = vector.load %arg7[%c0_27, %c0_28] : memref<128x256xbf16, #tpu.memory_space<vmem>>, vector<128x256xbf16>
    %cst_29 = arith.constant dense<0.000000e+00> : vector<8x256xf32>
    %43 = tpu.matmul %41, %42, %cst_29 {dimension_numbers = #tpu.dot_dimension_numbers<[1], [0], [0], [1], [0, 0, 1, 1], [], []>} : vector<8x128xbf16>, vector<128x256xbf16>, vector<8x256xf32> -> vector<8x256xf32>
    %44 = vector.broadcast %40 : vector<1x256xf32> to vector<8x256xf32>
    %45 = arith.addf %43, %44 : vector<8x256xf32>
    %cst_30 = arith.constant 0.000000e+00 : f32
    %46 = vector.broadcast %cst_30 : f32 to vector<8x256xf32>
    %47 = arith.maximumf %45, %46 : vector<8x256xf32>
    %c0_31 = arith.constant 0 : index
    %c1152 = arith.constant 1152 : index
    %48 = vector.load %arg9[%c0_31, %c1152] : memref<1x1280xf32, #tpu.memory_space<vmem>>, vector<1x128xf32>
    %49 = arith.truncf %47 : vector<8x256xf32> to vector<8x256xbf16>
    %c0_32 = arith.constant 0 : index
    %c0_33 = arith.constant 0 : index
    %50 = vector.load %arg8[%c0_32, %c0_33] : memref<256x128xbf16, #tpu.memory_space<vmem>>, vector<256x128xbf16>
    %cst_34 = arith.constant dense<0.000000e+00> : vector<8x128xf32>
    %51 = tpu.matmul %49, %50, %cst_34 {dimension_numbers = #tpu.dot_dimension_numbers<[1], [0], [0], [1], [0, 0, 1, 1], [], []>} : vector<8x256xbf16>, vector<256x128xbf16>, vector<8x128xf32> -> vector<8x128xf32>
    %52 = vector.broadcast %48 : vector<1x128xf32> to vector<8x128xf32>
    %53 = arith.addf %51, %52 : vector<8x128xf32>
    %54 = tpu.iota {dimensions = array<i32: 1>} : vector<8x128xi32>
    %c10_i32 = arith.constant 10 : i32
    %55 = vector.broadcast %c10_i32 : i32 to vector<8x128xi32>
    %56 = arith.cmpi slt, %54, %55 : vector<8x128xi32>
    %cst_35 = arith.constant -1.000000e+30 : f32
    %57 = vector.broadcast %cst_35 : f32 to vector<8x128xf32>
    %58 = arith.select %56, %53, %57 : vector<8x128xi1>, vector<8x128xf32>
    %cst_36 = arith.constant dense<0xFF800000> : vector<8xf32>
    %59 = vector.multi_reduction <maximumf>, %58, %cst_36 [1] : vector<8x128xf32> to vector<8xf32>
    %60 = vector.shape_cast %59 : vector<8xf32> to vector<8x1xf32>
    %61 = vector.broadcast %60 : vector<8x1xf32> to vector<8x128xf32>
    %62 = arith.subf %58, %61 : vector<8x128xf32>
    %63 = math.exp %62 : vector<8x128xf32>
    %cst_37 = arith.constant dense<0.000000e+00> : vector<8xf32>
    %64 = vector.multi_reduction <add>, %63, %cst_37 [1] : vector<8x128xf32> to vector<8xf32>
    %65 = vector.shape_cast %64 : vector<8xf32> to vector<8x1xf32>
    %66 = tpu.reciprocal %65 {approx = true} : vector<8x1xf32> -> vector<8x1xf32>
    %67 = vector.broadcast %66 : vector<8x1xf32> to vector<8x128xf32>
    %68 = arith.mulf %63, %67 : vector<8x128xf32>
    %c0_38 = arith.constant 0 : index
    %c0_39 = arith.constant 0 : index
    %69 = vector.load %arg10[%c0_38, %c0_39] : memref<8x128xf32, #tpu.memory_space<vmem>>, vector<8x128xf32>
    tpu.vector_store %arg10[%c0_38, %c0_39], %68 {strides = array<i32>} : memref<8x128xf32, #tpu.memory_space<vmem>>, vector<8x128xf32>,
    return
  }
  func.func @transform_0(%arg0: i32) -> (i32, i32) {
    %c0_i32 = arith.constant 0 : i32
    %c0_i32_0 = arith.constant 0 : i32
    return %arg0, %c0_i32 : i32, i32
  }
  func.func @transform_1(%arg0: i32) -> (i32, i32) {
    %c0_i32 = arith.constant 0 : i32
    %c0_i32_0 = arith.constant 0 : i32
    %c0_i32_1 = arith.constant 0 : i32
    return %c0_i32, %c0_i32_0 : i32, i32
  }
  func.func @transform_2(%arg0: i32) -> (i32, i32) {
    %c0_i32 = arith.constant 0 : i32
    %c0_i32_0 = arith.constant 0 : i32
    %c0_i32_1 = arith.constant 0 : i32
    return %c0_i32, %c0_i32_0 : i32, i32
  }
  func.func @transform_3(%arg0: i32) -> (i32, i32) {
    %c0_i32 = arith.constant 0 : i32
    %c0_i32_0 = arith.constant 0 : i32
    %c0_i32_1 = arith.constant 0 : i32
    return %c0_i32, %c0_i32_0 : i32, i32
  }
  func.func @transform_4(%arg0: i32) -> (i32, i32) {
    %c0_i32 = arith.constant 0 : i32
    %c0_i32_0 = arith.constant 0 : i32
    %c0_i32_1 = arith.constant 0 : i32
    return %c0_i32, %c0_i32_0 : i32, i32
  }
  func.func @transform_5(%arg0: i32) -> (i32, i32) {
    %c0_i32 = arith.constant 0 : i32
    %c0_i32_0 = arith.constant 0 : i32
    %c0_i32_1 = arith.constant 0 : i32
    return %c0_i32, %c0_i32_0 : i32, i32
  }
  func.func @transform_6(%arg0: i32) -> (i32, i32) {
    %c0_i32 = arith.constant 0 : i32
    %c0_i32_0 = arith.constant 0 : i32
    %c0_i32_1 = arith.constant 0 : i32
    return %c0_i32, %c0_i32_0 : i32, i32
  }
  func.func @transform_7(%arg0: i32) -> (i32, i32) {
    %c0_i32 = arith.constant 0 : i32
    %c0_i32_0 = arith.constant 0 : i32
    %c0_i32_1 = arith.constant 0 : i32
    return %c0_i32, %c0_i32_0 : i32, i32
  }
  func.func @transform_8(%arg0: i32) -> (i32, i32) {
    %c0_i32 = arith.constant 0 : i32
    %c0_i32_0 = arith.constant 0 : i32
    %c0_i32_1 = arith.constant 0 : i32
    return %c0_i32, %c0_i32_0 : i32, i32
  }
  func.func @transform_9(%arg0: i32) -> (i32, i32) {
    %c0_i32 = arith.constant 0 : i32
    %c0_i32_0 = arith.constant 0 : i32
    return %arg0, %c0_i32 : i32, i32
  }
}

</mosaic_0001>

<llo_original>
// kernel: mlp_forward.1
$region0: #{mlp_forward.1}
  #allocation0 [shape = 'u32[]', space=smem, size = 0x4, offset = 0x4, fixed_abs, tag = 'smem constant byte address 0x4 - core index']
  #allocation1 [shape = 'u32[72,128]{1,0:T(1,128)}', space=vmem, size = 0x9000, scoped, tag = 'internal scratch']
  %s0 = inlined_call_operand.vmem [shape: bf16[8,128], index: 0, kind: input, shape index: {}]
  %s1 = inlined_call_operand.vmem [shape: bf16[128,256], index: 1, kind: input, shape index: {}]
  %s2 = inlined_call_operand.vmem [shape: bf16[256,256], index: 2, kind: input, shape index: {}]
  %s3 = inlined_call_operand.vmem [shape: bf16[256,128], index: 3, kind: input, shape index: {}]
  %s4 = inlined_call_operand.vmem [shape: bf16[128,128], index: 4, kind: input, shape index: {}]
  %s5 = inlined_call_operand.vmem [shape: bf16[128,128], index: 5, kind: input, shape index: {}]
  %s6 = inlined_call_operand.vmem [shape: bf16[128,256], index: 6, kind: input, shape index: {}]
  %s7 = inlined_call_operand.vmem [shape: bf16[256,128], index: 7, kind: input, shape index: {}]
  %s8 = inlined_call_operand.vmem [shape: f32[1,1280], index: 8, kind: input, shape index: {}]
  %s9 = inlined_call_operand.hbm [shape: f32[8,128], index: 9, kind: output, shape index: {}]
  %s10 = sld [smem:[#allocation0]]
  $region46: #{mlp_forward.1} parent=0
    _
  %s12 = ssub.s32 1, %s10
  %s13 = scalar_select 0, %s12, %s10
  $region1: #{mlp_forward.1} parent=0
    #allocation2 [shape = 'u8[4096]{0}', space=vmem, size = 0x1000, scoped, tag = 'output window, operand 0, single buffered']
    #allocation3 [shape = 's32[1]{0}', space=sflag, size = 0x4, scoped, tag = 'scoped memory for mlp_forward.1']
    %14 = vsyncpa [#allocation3], 0
    // Predicated region
    $region2: #{mlp_forward.1} parent=1 // pred_check
      _
    $region3: #{mlp_forward.1} parent=1 // pred_check_branch
      %16 = sbr.rel (0) target = $region5
    $region4: #{mlp_forward.1} parent=1 // pred_region
      _
    $region5: #{mlp_forward.1} parent=1 // pred_fallthru
      _
    // Predicated region
    $region6: #{mlp_forward.1} parent=1 // pred_check
      _
    $region7: #{mlp_forward.1} parent=1 // pred_check_branch
      %18 = sbr.rel (0) target = $region9
    $region8: #{mlp_forward.1} parent=1 // pred_region
      _
    $region9: #{mlp_forward.1} parent=1 // pred_fallthru
      _
    // Predicated region
    $region10: #{mlp_forward.1} parent=1 // pred_check
      _
    $region11: #{mlp_forward.1} parent=1 // pred_check_branch
      %20 = sbr.rel (0) target = $region13
    $region12: #{mlp_forward.1} parent=1 // pred_region
      _
    $region13: #{mlp_forward.1} parent=1 // pred_fallthru
      _
    // Predicated region
    $region14: #{mlp_forward.1} parent=1 // pred_check
      _
    $region15: #{mlp_forward.1} parent=1 // pred_check_branch
      %22 = sbr.rel (0) target = $region17
    $region16: #{mlp_forward.1} parent=1 // pred_region
      _
    $region17: #{mlp_forward.1} parent=1 // pred_fallthru
      _
    // Predicated region
    $region18: #{mlp_forward.1} parent=1 // pred_check
      _
    $region19: #{mlp_forward.1} parent=1 // pred_check_branch
      %24 = sbr.rel (0) target = $region21
    $region20: #{mlp_forward.1} parent=1 // pred_region
      _
    $region21: #{mlp_forward.1} parent=1 // pred_fallthru
      _
    // Predicated region
    $region22: #{mlp_forward.1} parent=1 // pred_check
      _
    $region23: #{mlp_forward.1} parent=1 // pred_check_branch
      %26 = sbr.rel (0) target = $region25
    $region24: #{mlp_forward.1} parent=1 // pred_region
      _
    $region25: #{mlp_forward.1} parent=1 // pred_fallthru
      _
    // Predicated region
    $region26: #{mlp_forward.1} parent=1 // pred_check
      _
    $region27: #{mlp_forward.1} parent=1 // pred_check_branch
      %28 = sbr.rel (0) target = $region29
    $region28: #{mlp_forward.1} parent=1 // pred_region
      _
    $region29: #{mlp_forward.1} parent=1 // pred_fallthru
      _
    // Predicated region
    $region30: #{mlp_forward.1} parent=1 // pred_check
      _
    $region31: #{mlp_forward.1} parent=1 // pred_check_branch
      %30 = sbr.rel (0) target = $region33
    $region32: #{mlp_forward.1} parent=1 // pred_region
      _
    $region33: #{mlp_forward.1} parent=1 // pred_fallthru
      _
    // Predicated region
    $region34: #{mlp_forward.1} parent=1 // pred_check
      _
    $region35: #{mlp_forward.1} parent=1 // pred_check_branch
      %32 = sbr.rel (0) target = $region37
    $region36: #{mlp_forward.1} parent=1 // pred_region
      _
    $region37: #{mlp_forward.1} parent=1 // pred_fallthru
      _
    %v33 = vld [vmem:[%s0] sm:$0xf]
    %v34 = vld [vmem:[%s8] sm:$0x3]
    %v35 = vld [vmem:[%s1] sm:$0xff]
    %v36 = vld [vmem:[%s1 + $0x8] sm:$0xff]
    %v37 = vld [vmem:[%s1 + $0x10] sm:$0xff]
    %v38 = vld [vmem:[%s1 + $0x18] sm:$0xff]
    %v39 = vld [vmem:[%s1 + $0x20] sm:$0xff]
    %v40 = vld [vmem:[%s1 + $0x28] sm:$0xff]
    %v41 = vld [vmem:[%s1 + $0x30] sm:$0xff]
    %v42 = vld [vmem:[%s1 + $0x38] sm:$0xff]
    %v43 = vld [vmem:[%s1 + $0x40] sm:$0xff]
    %v44 = vld [vmem:[%s1 + $0x48] sm:$0xff]
    %v45 = vld [vmem:[%s1 + $0x50] sm:$0xff]
    %v46 = vld [vmem:[%s1 + $0x58] sm:$0xff]
    %v47 = vld [vmem:[%s1 + $0x60] sm:$0xff]
    %v48 = vld [vmem:[%s1 + $0x68] sm:$0xff]
    %v49 = vld [vmem:[%s1 + $0x70] sm:$0xff]
    %v50 = vld [vmem:[%s1 + $0x78] sm:$0xff]
    %v52 = vperm.slane %v34, 0
    %v53 = vperm.slane %v34, 1
    %v72 = vunpack.c.l.b16 %v35
    %v73 = vunpack.c.h.b16 %v35
    %v74 = vunpack.c.l.b16 %v36
    %v75 = vunpack.c.h.b16 %v36
    %v76 = vunpack.c.l.b16 %v37
    %v77 = vunpack.c.h.b16 %v37
    %v78 = vunpack.c.l.b16 %v38
    %v79 = vunpack.c.h.b16 %v38
    %v80 = vunpack.c.l.b16 %v39
    %v81 = vunpack.c.h.b16 %v39
    %v82 = vunpack.c.l.b16 %v40
    %v83 = vunpack.c.h.b16 %v40
    %v84 = vunpack.c.l.b16 %v41
    %v85 = vunpack.c.h.b16 %v41
    %v86 = vunpack.c.l.b16 %v42
    %v87 = vunpack.c.h.b16 %v42
    %v88 = vunpack.c.l.b16 %v43
    %v89 = vunpack.c.h.b16 %v43
    %v90 = vunpack.c.l.b16 %v44
    %v91 = vunpack.c.h.b16 %v44
    %v92 = vunpack.c.l.b16 %v45
    %v93 = vunpack.c.h.b16 %v45
    %v94 = vunpack.c.l.b16 %v46
    %v95 = vunpack.c.h.b16 %v46
    %v96 = vunpack.c.l.b16 %v47
    %v97 = vunpack.c.h.b16 %v47
    %v98 = vunpack.c.l.b16 %v48
    %v99 = vunpack.c.h.b16 %v48
    %v100 = vunpack.c.l.b16 %v49
    %v101 = vunpack.c.h.b16 %v49
    %v102 = vunpack.c.l.b16 %v50
    %v103 = vunpack.c.h.b16 %v50
    %v104 = vpack.c.b16 %v74, %v72
    %v105 = vpack.c.b16 %v75, %v73
    %v106 = vpack.c.b16 %v78, %v76
    %v107 = vpack.c.b16 %v79, %v77
    %v108 = vpack.c.b16 %v82, %v80
    %v109 = vpack.c.b16 %v83, %v81
    %v110 = vpack.c.b16 %v86, %v84
    %v111 = vpack.c.b16 %v87, %v85
    %v112 = vpack.c.b16 %v90, %v88
    %v113 = vpack.c.b16 %v91, %v89
    %v114 = vpack.c.b16 %v94, %v92
    %v115 = vpack.c.b16 %v95, %v93
    %v116 = vpack.c.b16 %v98, %v96
    %v117 = vpack.c.b16 %v99, %v97
    %v118 = vpack.c.b16 %v102, %v100
    %v119 = vpack.c.b16 %v103, %v101
    %136 = vmatpush.bf16.msra.mxu0 %v118
    %137 = vmatpush.bf16.msra.mxu0 %v116
    %138 = vmatpush.bf16.msra.mxu0 %v114
    %139 = vmatpush.bf16.msra.mxu0 %v112
    %140 = vmatpush.bf16.msra.mxu0 %v110
    %141 = vmatpush.bf16.msra.mxu0 %v108
    %142 = vmatpush.bf16.msra.mxu0 %v106
    %143 = vmatpush.bf16.msra.mxu0 %v104
    %144 = vmatmul.bf16.gmra.mxu0 %v33
    %v145 = vpop.f32.mrf.mxu0
    %v146 = vadd.f32 %v52, %v145
    %v147 = vpop.f32.mrf.mxu0
    %148 = vdwg.mxu0
    %149 = vmatpush.bf16.msra.mxu0 %v119
    %150 = vmatpush.bf16.msra.mxu0 %v117
    %151 = vmatpush.bf16.msra.mxu0 %v115
    %152 = vmatpush.bf16.msra.mxu0 %v113
    %153 = vmatpush.bf16.msra.mxu0 %v111
    %154 = vmatpush.bf16.msra.mxu0 %v109
    %155 = vmatpush.bf16.msra.mxu0 %v107
    %156 = vmatpush.bf16.msra.mxu0 %v105
    %157 = vmatmul.bf16.gmra.mxu0 %v33
    %v158 = vpop.f32.mrf.mxu0
    %v159 = vadd.f32 %v53, %v158
    %v160 = vpop.f32.mrf.mxu0
    %161 = vdwg.mxu0
    %v162 = vmax.f32 %v146, 0.0
    %v163 = vmax.f32 %v159, 0.0
    %v164 = vld [vmem:[%s8 + $0x2] sm:$0x3]
    %v165 = vpack.c.bf16 %v162, %v162
    %v166 = vpack.c.bf16 %v163, %v163
    %v167 = vld [vmem:[%s2] sm:$0xff]
    %v168 = vld [vmem:[%s2 + $0x8] sm:$0xff]
    %v169 = vld [vmem:[%s2 + $0x10] sm:$0xff]
    %v170 = vld [vmem:[%s2 + $0x18] sm:$0xff]
    %v171 = vld [vmem:[%s2 + $0x20] sm:$0xff]
    %v172 = vld [vmem:[%s2 + $0x28] sm:$0xff]
    %v173 = vld [vmem:[%s2 + $0x30] sm:$0xff]
    %v174 = vld [vmem:[%s2 + $0x38] sm:$0xff]
    %v175 = vld [vmem:[%s2 + $0x40] sm:$0xff]
    %v176 = vld [vmem:[%s2 + $0x48] sm:$0xff]
    %v177 = vld [vmem:[%s2 + $0x50] sm:$0xff]
    %v178 = vld [vmem:[%s2 + $0x58] sm:$0xff]
    %v179 = vld [vmem:[%s2 + $0x60] sm:$0xff]
    %v180 = vld [vmem:[%s2 + $0x68] sm:$0xff]
    %v181 = vld [vmem:[%s2 + $0x70] sm:$0xff]
    %v182 = vld [vmem:[%s2 + $0x78] sm:$0xff]
    %v183 = vld [vmem:[%s2 + $0x80] sm:$0xff]
    %v184 = vld [vmem:[%s2 + $0x88] sm:$0xff]
    %v185 = vld [vmem:[%s2 + $0x90] sm:$0xff]
    %v186 = vld [vmem:[%s2 + $0x98] sm:$0xff]
    %v187 = vld [vmem:[%s2 + $0xa0] sm:$0xff]
    %v188 = vld [vmem:[%s2 + $0xa8] sm:$0xff]
    %v189 = vld [vmem:[%s2 + $0xb0] sm:$0xff]
    %v190 = vld [vmem:[%s2 + $0xb8] sm:$0xff]
    %v191 = vld [vmem:[%s2 + $0xc0] sm:$0xff]
    %v192 = vld [vmem:[%s2 + $0xc8] sm:$0xff]
    %v193 = vld [vmem:[%s2 + $0xd0] sm:$0xff]
    %v194 = vld [vmem:[%s2 + $0xd8] sm:$0xff]
    %v195 = vld [vmem:[%s2 + $0xe0] sm:$0xff]
    %v196 = vld [vmem:[%s2 + $0xe8] sm:$0xff]
    %v197 = vld [vmem:[%s2 + $0xf0] sm:$0xff]
    %v198 = vld [vmem:[%s2 + $0xf8] sm:$0xff]
    %v200 = vperm.slane %v164, 0
    %v201 = vperm.slane %v164, 1
    %v236 = vunpack.c.l.b16 %v167
    %v237 = vunpack.c.h.b16 %v167
    %v238 = vunpack.c.l.b16 %v168
    %v239 = vunpack.c.h.b16 %v168
    %v240 = vunpack.c.l.b16 %v169
    %v241 = vunpack.c.h.b16 %v169
    %v242 = vunpack.c.l.b16 %v170
    %v243 = vunpack.c.h.b16 %v170
    %v244 = vunpack.c.l.b16 %v171
    %v245 = vunpack.c.h.b16 %v171
    %v246 = vunpack.c.l.b16 %v172
    %v247 = vunpack.c.h.b16 %v172
    %v248 = vunpack.c.l.b16 %v173
    %v249 = vunpack.c.h.b16 %v173
    %v250 = vunpack.c.l.b16 %v174
    %v251 = vunpack.c.h.b16 %v174
    %v252 = vunpack.c.l.b16 %v175
    %v253 = vunpack.c.h.b16 %v175
    %v254 = vunpack.c.l.b16 %v176
    %v255 = vunpack.c.h.b16 %v176
    %v256 = vunpack.c.l.b16 %v177
    %v257 = vunpack.c.h.b16 %v177
    %v258 = vunpack.c.l.b16 %v178
    %v259 = vunpack.c.h.b16 %v178
    %v260 = vunpack.c.l.b16 %v179
    %v261 = vunpack.c.h.b16 %v179
    %v262 = vunpack.c.l.b16 %v180
    %v263 = vunpack.c.h.b16 %v180
    %v264 = vunpack.c.l.b16 %v181
    %v265 = vunpack.c.h.b16 %v181
    %v266 = vunpack.c.l.b16 %v182
    %v267 = vunpack.c.h.b16 %v182
    %v268 = vunpack.c.l.b16 %v183
    %v269 = vunpack.c.h.b16 %v183
    %v270 = vunpack.c.l.b16 %v184
    %v271 = vunpack.c.h.b16 %v184
    %v272 = vunpack.c.l.b16 %v185
    %v273 = vunpack.c.h.b16 %v185
    %v274 = vunpack.c.l.b16 %v186
    %v275 = vunpack.c.h.b16 %v186
    %v276 = vunpack.c.l.b16 %v187
    %v277 = vunpack.c.h.b16 %v187
    %v278 = vunpack.c.l.b16 %v188
    %v279 = vunpack.c.h.b16 %v188
    %v280 = vunpack.c.l.b16 %v189
    %v281 = vunpack.c.h.b16 %v189
    %v282 = vunpack.c.l.b16 %v190
    %v283 = vunpack.c.h.b16 %v190
    %v284 = vunpack.c.l.b16 %v191
    %v285 = vunpack.c.h.b16 %v191
    %v286 = vunpack.c.l.b16 %v192
    %v287 = vunpack.c.h.b16 %v192
    %v288 = vunpack.c.l.b16 %v193
    %v289 = vunpack.c.h.b16 %v193
    %v290 = vunpack.c.l.b16 %v194
    %v291 = vunpack.c.h.b16 %v194
    %v292 = vunpack.c.l.b16 %v195
    %v293 = vunpack.c.h.b16 %v195
    %v294 = vunpack.c.l.b16 %v196
    %v295 = vunpack.c.h.b16 %v196
    %v296 = vunpack.c.l.b16 %v197
    %v297 = vunpack.c.h.b16 %v197
    %v298 = vunpack.c.l.b16 %v198
    %v299 = vunpack.c.h.b16 %v198
    %v300 = vpack.c.b16 %v238, %v236
    %v301 = vpack.c.b16 %v239, %v237
    %v302 = vpack.c.b16 %v242, %v240
    %v303 = vpack.c.b16 %v243, %v241
    %v304 = vpack.c.b16 %v246, %v244
    %v305 = vpack.c.b16 %v247, %v245
    %v306 = vpack.c.b16 %v250, %v248
    %v307 = vpack.c.b16 %v251, %v249
    %v308 = vpack.c.b16 %v254, %v252
    %v309 = vpack.c.b16 %v255, %v253
    %v310 = vpack.c.b16 %v258, %v256
    %v311 = vpack.c.b16 %v259, %v257
    %v312 = vpack.c.b16 %v262, %v260
    %v313 = vpack.c.b16 %v263, %v261
    %v314 = vpack.c.b16 %v266, %v264
    %v315 = vpack.c.b16 %v267, %v265
    %v316 = vpack.c.b16 %v270, %v268
    %v317 = vpack.c.b16 %v271, %v269
    %v318 = vpack.c.b16 %v274, %v272
    %v319 = vpack.c.b16 %v275, %v273
    %v320 = vpack.c.b16 %v278, %v276
    %v321 = vpack.c.b16 %v279, %v277
    %v322 = vpack.c.b16 %v282, %v280
    %v323 = vpack.c.b16 %v283, %v281
    %v324 = vpack.c.b16 %v286, %v284
    %v325 = vpack.c.b16 %v287, %v285
    %v326 = vpack.c.b16 %v290, %v288
    %v327 = vpack.c.b16 %v291, %v289
    %v328 = vpack.c.b16 %v294, %v292
    %v329 = vpack.c.b16 %v295, %v293
    %v330 = vpack.c.b16 %v298, %v296
    %v331 = vpack.c.b16 %v299, %v297
    %364 = vmatpush.bf16.msra.mxu0 %v314
    %365 = vmatpush.bf16.msra.mxu0 %v312
    %366 = vmatpush.bf16.msra.mxu0 %v310
    %367 = vmatpush.bf16.msra.mxu0 %v308
    %368 = vmatpush.bf16.msra.mxu0 %v306
    %369 = vmatpush.bf16.msra.mxu0 %v304
    %370 = vmatpush.bf16.msra.mxu0 %v302
    %371 = vmatpush.bf16.msra.mxu0 %v300
    %372 = vmatmul.bf16.gmra.mxu0 %v165
    %v373 = vpop.f32.mrf.mxu0
    %v374 = vadd.f32 %v200, %v373
    %v375 = vpop.f32.mrf.mxu0
    %376 = vdwg.mxu0
    %377 = vmatpush.bf16.msra.mxu0 %v330
    %378 = vmatpush.bf16.msra.mxu0 %v328
    %379 = vmatpush.bf16.msra.mxu0 %v326
    %380 = vmatpush.bf16.msra.mxu0 %v324
    %381 = vmatpush.bf16.msra.mxu0 %v322
    %382 = vmatpush.bf16.msra.mxu0 %v320
    %383 = vmatpush.bf16.msra.mxu0 %v318
    %384 = vmatpush.bf16.msra.mxu0 %v316
    %385 = vmatmul.bf16.gmra.mxu0 %v166
    %v386 = vpop.f32.mrf.mxu0
    %v387 = vadd.f32 %v374, %v386
    %v388 = vpop.f32.mrf.mxu0
    %389 = vdwg.mxu0
    %390 = vmatpush.bf16.msra.mxu0 %v315
    %391 = vmatpush.bf16.msra.mxu0 %v313
    %392 = vmatpush.bf16.msra.mxu0 %v311
    %393 = vmatpush.bf16.msra.mxu0 %v309
    %394 = vmatpush.bf16.msra.mxu0 %v307
    %395 = vmatpush.bf16.msra.mxu0 %v305
    %396 = vmatpush.bf16.msra.mxu0 %v303
    %397 = vmatpush.bf16.msra.mxu0 %v301
    %398 = vmatmul.bf16.gmra.mxu0 %v165
    %v399 = vpop.f32.mrf.mxu0
    %v400 = vadd.f32 %v201, %v399
    %v401 = vpop.f32.mrf.mxu0
    %402 = vdwg.mxu0
    %403 = vmatpush.bf16.msra.mxu0 %v331
    %404 = vmatpush.bf16.msra.mxu0 %v329
    %405 = vmatpush.bf16.msra.mxu0 %v327
    %406 = vmatpush.bf16.msra.mxu0 %v325
    %407 = vmatpush.bf16.msra.mxu0 %v323
    %408 = vmatpush.bf16.msra.mxu0 %v321
    %409 = vmatpush.bf16.msra.mxu0 %v319
    %410 = vmatpush.bf16.msra.mxu0 %v317
    %411 = vmatmul.bf16.gmra.mxu0 %v166
    %v412 = vpop.f32.mrf.mxu0
    %v413 = vadd.f32 %v400, %v412
    %v414 = vpop.f32.mrf.mxu0
    %415 = vdwg.mxu0
    %v416 = vmax.f32 %v387, 0.0
    %v417 = vmax.f32 %v413, 0.0
    %v418 = vld [vmem:[%s8 + $0x4] sm:$0x1]
    %v419 = vpack.c.bf16 %v416, %v416
    %v420 = vpack.c.bf16 %v417, %v417
    %v421 = vld [vmem:[%s3] sm:$0xf]
    %v422 = vld [vmem:[%s3 + $0x4] sm:$0xf]
    %v423 = vld [vmem:[%s3 + $0x8] sm:$0xf]
    %v424 = vld [vmem:[%s3 + $0xc] sm:$0xf]
    %v425 = vld [vmem:[%s3 + $0x10] sm:$0xf]
    %v426 = vld [vmem:[%s3 + $0x14] sm:$0xf]
    %v427 = vld [vmem:[%s3 + $0x18] sm:$0xf]
    %v428 = vld [vmem:[%s3 + $0x1c] sm:$0xf]
    %v429 = vld [vmem:[%s3 + $0x20] sm:$0xf]
    %v430 = vld [vmem:[%s3 + $0x24] sm:$0xf]
    %v431 = vld [vmem:[%s3 + $0x28] sm:$0xf]
    %v432 = vld [vmem:[%s3 + $0x2c] sm:$0xf]
    %v433 = vld [vmem:[%s3 + $0x30] sm:$0xf]
    %v434 = vld [vmem:[%s3 + $0x34] sm:$0xf]
    %v435 = vld [vmem:[%s3 + $0x38] sm:$0xf]
    %v436 = vld [vmem:[%s3 + $0x3c] sm:$0xf]
    %v437 = vld [vmem:[%s3 + $0x40] sm:$0xf]
    %v438 = vld [vmem:[%s3 + $0x44] sm:$0xf]
    %v439 = vld [vmem:[%s3 + $0x48] sm:$0xf]
    %v440 = vld [vmem:[%s3 + $0x4c] sm:$0xf]
    %v441 = vld [vmem:[%s3 + $0x50] sm:$0xf]
    %v442 = vld [vmem:[%s3 + $0x54] sm:$0xf]
    %v443 = vld [vmem:[%s3 + $0x58] sm:$0xf]
    %v444 = vld [vmem:[%s3 + $0x5c] sm:$0xf]
    %v445 = vld [vmem:[%s3 + $0x60] sm:$0xf]
    %v446 = vld [vmem:[%s3 + $0x64] sm:$0xf]
    %v447 = vld [vmem:[%s3 + $0x68] sm:$0xf]
    %v448 = vld [vmem:[%s3 + $0x6c] sm:$0xf]
    %v449 = vld [vmem:[%s3 + $0x70] sm:$0xf]
    %v450 = vld [vmem:[%s3 + $0x74] sm:$0xf]
    %v451 = vld [vmem:[%s3 + $0x78] sm:$0xf]
    %v452 = vld [vmem:[%s3 + $0x7c] sm:$0xf]
    %v454 = vperm.slane %v418, 0
    %v488 = vunpack.c.l.b16 %v421
    %v489 = vunpack.c.l.b16 %v422
    %v490 = vunpack.c.l.b16 %v423
    %v491 = vunpack.c.l.b16 %v424
    %v492 = vunpack.c.l.b16 %v425
    %v493 = vunpack.c.l.b16 %v426
    %v494 = vunpack.c.l.b16 %v427
    %v495 = vunpack.c.l.b16 %v428
    %v496 = vunpack.c.l.b16 %v429
    %v497 = vunpack.c.l.b16 %v430
    %v498 = vunpack.c.l.b16 %v431
    %v499 = vunpack.c.l.b16 %v432
    %v500 = vunpack.c.l.b16 %v433
    %v501 = vunpack.c.l.b16 %v434
    %v502 = vunpack.c.l.b16 %v435
    %v503 = vunpack.c.l.b16 %v436
    %v504 = vunpack.c.l.b16 %v437
    %v505 = vunpack.c.l.b16 %v438
    %v506 = vunpack.c.l.b16 %v439
    %v507 = vunpack.c.l.b16 %v440
    %v508 = vunpack.c.l.b16 %v441
    %v509 = vunpack.c.l.b16 %v442
    %v510 = vunpack.c.l.b16 %v443
    %v511 = vunpack.c.l.b16 %v444
    %v512 = vunpack.c.l.b16 %v445
    %v513 = vunpack.c.l.b16 %v446
    %v514 = vunpack.c.l.b16 %v447
    %v515 = vunpack.c.l.b16 %v448
    %v516 = vunpack.c.l.b16 %v449
    %v517 = vunpack.c.l.b16 %v450
    %v518 = vunpack.c.l.b16 %v451
    %v519 = vunpack.c.l.b16 %v452
    %v520 = vpack.c.b16 %v489, %v488
    %v521 = vpack.c.b16 %v491, %v490
    %v522 = vpack.c.b16 %v493, %v492
    %v523 = vpack.c.b16 %v495, %v494
    %v524 = vpack.c.b16 %v497, %v496
    %v525 = vpack.c.b16 %v499, %v498
    %v526 = vpack.c.b16 %v501, %v500
    %v527 = vpack.c.b16 %v503, %v502
    %v528 = vpack.c.b16 %v505, %v504
    %v529 = vpack.c.b16 %v507, %v506
    %v530 = vpack.c.b16 %v509, %v508
    %v531 = vpack.c.b16 %v511, %v510
    %v532 = vpack.c.b16 %v513, %v512
    %v533 = vpack.c.b16 %v515, %v514
    %v534 = vpack.c.b16 %v517, %v516
    %v535 = vpack.c.b16 %v519, %v518
    %552 = vmatpush.bf16.msra.mxu0 %v527
    %553 = vmatpush.bf16.msra.mxu0 %v526
    %554 = vmatpush.bf16.msra.mxu0 %v525
    %555 = vmatpush.bf16.msra.mxu0 %v524
    %556 = vmatpush.bf16.msra.mxu0 %v523
    %557 = vmatpush.bf16.msra.mxu0 %v522
    %558 = vmatpush.bf16.msra.mxu0 %v521
    %559 = vmatpush.bf16.msra.mxu0 %v520
    %560 = vmatmul.bf16.gmra.mxu0 %v419
    %v561 = vpop.f32.mrf.mxu0
    %v562 = vadd.f32 %v454, %v561
    %v563 = vpop.f32.mrf.mxu0
    %564 = vdwg.mxu0
    %565 = vmatpush.bf16.msra.mxu0 %v535
    %566 = vmatpush.bf16.msra.mxu0 %v534
    %567 = vmatpush.bf16.msra.mxu0 %v533
    %568 = vmatpush.bf16.msra.mxu0 %v532
    %569 = vmatpush.bf16.msra.mxu0 %v531
    %570 = vmatpush.bf16.msra.mxu0 %v530
    %571 = vmatpush.bf16.msra.mxu0 %v529
    %572 = vmatpush.bf16.msra.mxu0 %v528
    %573 = vmatmul.bf16.gmra.mxu0 %v420
    %v574 = vpop.f32.mrf.mxu0
    %v575 = vadd.f32 %v562, %v574
    %v576 = vpop.f32.mrf.mxu0
    %577 = vdwg.mxu0
    %v578 = vmax.f32 %v575, 0.0
    %v579 = vld [vmem:[%s8 + $0x5] sm:$0x1]
    %v580 = vpack.c.bf16 %v578, %v578
    %v581 = vld [vmem:[%s4] sm:$0xf]
    %v582 = vld [vmem:[%s4 + $0x4] sm:$0xf]
    %v583 = vld [vmem:[%s4 + $0x8] sm:$0xf]
    %v584 = vld [vmem:[%s4 + $0xc] sm:$0xf]
    %v585 = vld [vmem:[%s4 + $0x10] sm:$0xf]
    %v586 = vld [vmem:[%s4 + $0x14] sm:$0xf]
    %v587 = vld [vmem:[%s4 + $0x18] sm:$0xf]
    %v588 = vld [vmem:[%s4 + $0x1c] sm:$0xf]
    %v589 = vld [vmem:[%s4 + $0x20] sm:$0xf]
    %v590 = vld [vmem:[%s4 + $0x24] sm:$0xf]
    %v591 = vld [vmem:[%s4 + $0x28] sm:$0xf]
    %v592 = vld [vmem:[%s4 + $0x2c] sm:$0xf]
    %v593 = vld [vmem:[%s4 + $0x30] sm:$0xf]
    %v594 = vld [vmem:[%s4 + $0x34] sm:$0xf]
    %v595 = vld [vmem:[%s4 + $0x38] sm:$0xf]
    %v596 = vld [vmem:[%s4 + $0x3c] sm:$0xf]
    %v598 = vperm.slane %v579, 0
    %v616 = vunpack.c.l.b16 %v581
    %v617 = vunpack.c.l.b16 %v582
    %v618 = vunpack.c.l.b16 %v583
    %v619 = vunpack.c.l.b16 %v584
    %v620 = vunpack.c.l.b16 %v585
    %v621 = vunpack.c.l.b16 %v586
    %v622 = vunpack.c.l.b16 %v587
    %v623 = vunpack.c.l.b16 %v588
    %v624 = vunpack.c.l.b16 %v589
    %v625 = vunpack.c.l.b16 %v590
    %v626 = vunpack.c.l.b16 %v591
    %v627 = vunpack.c.l.b16 %v592
    %v628 = vunpack.c.l.b16 %v593
    %v629 = vunpack.c.l.b16 %v594
    %v630 = vunpack.c.l.b16 %v595
    %v631 = vunpack.c.l.b16 %v596
    %v632 = vpack.c.b16 %v617, %v616
    %v633 = vpack.c.b16 %v619, %v618
    %v634 = vpack.c.b16 %v621, %v620
    %v635 = vpack.c.b16 %v623, %v622
    %v636 = vpack.c.b16 %v625, %v624
    %v637 = vpack.c.b16 %v627, %v626
    %v638 = vpack.c.b16 %v629, %v628
    %v639 = vpack.c.b16 %v631, %v630
    %648 = vmatpush.bf16.msra.mxu0 %v639
    %649 = vmatpush.bf16.msra.mxu0 %v638
    %650 = vmatpush.bf16.msra.mxu0 %v637
    %651 = vmatpush.bf16.msra.mxu0 %v636
    %652 = vmatpush.bf16.msra.mxu0 %v635
    %653 = vmatpush.bf16.msra.mxu0 %v634
    %654 = vmatpush.bf16.msra.mxu0 %v633
    %655 = vmatpush.bf16.msra.mxu0 %v632
    %656 = vmatmul.bf16.gmra.mxu0 %v580
    %v657 = vpop.f32.mrf.mxu0
    %v658 = vadd.f32 %v598, %v657
    %v659 = vpop.f32.mrf.mxu0
    %660 = vdwg.mxu0
    %v661 = vmax.f32 %v658, 0.0
    %v662 = vld [vmem:[%s8 + $0x6] sm:$0x1]
    %v663 = vpack.c.bf16 %v661, %v661
    %v664 = vld [vmem:[%s5] sm:$0xf]
    %v665 = vld [vmem:[%s5 + $0x4] sm:$0xf]
    %v666 = vld [vmem:[%s5 + $0x8] sm:$0xf]
    %v667 = vld [vmem:[%s5 + $0xc] sm:$0xf]
    %v668 = vld [vmem:[%s5 + $0x10] sm:$0xf]
    %v669 = vld [vmem:[%s5 + $0x14] sm:$0xf]
    %v670 = vld [vmem:[%s5 + $0x18] sm:$0xf]
    %v671 = vld [vmem:[%s5 + $0x1c] sm:$0xf]
    %v672 = vld [vmem:[%s5 + $0x20] sm:$0xf]
    %v673 = vld [vmem:[%s5 + $0x24] sm:$0xf]
    %v674 = vld [vmem:[%s5 + $0x28] sm:$0xf]
    %v675 = vld [vmem:[%s5 + $0x2c] sm:$0xf]
    %v676 = vld [vmem:[%s5 + $0x30] sm:$0xf]
    %v677 = vld [vmem:[%s5 + $0x34] sm:$0xf]
    %v678 = vld [vmem:[%s5 + $0x38] sm:$0xf]
    %v679 = vld [vmem:[%s5 + $0x3c] sm:$0xf]
    %v681 = vperm.slane %v662, 0
    %v699 = vunpack.c.l.b16 %v664
    %v700 = vunpack.c.l.b16 %v665
    %v701 = vunpack.c.l.b16 %v666
    %v702 = vunpack.c.l.b16 %v667
    %v703 = vunpack.c.l.b16 %v668
    %v704 = vunpack.c.l.b16 %v669
    %v705 = vunpack.c.l.b16 %v670
    %v706 = vunpack.c.l.b16 %v671
    %v707 = vunpack.c.l.b16 %v672
    %v708 = vunpack.c.l.b16 %v673
    %v709 = vunpack.c.l.b16 %v674
    %v710 = vunpack.c.l.b16 %v675
    %v711 = vunpack.c.l.b16 %v676
    %v712 = vunpack.c.l.b16 %v677
    %v713 = vunpack.c.l.b16 %v678
    %v714 = vunpack.c.l.b16 %v679
    %v715 = vpack.c.b16 %v700, %v699
    %v716 = vpack.c.b16 %v702, %v701
    %v717 = vpack.c.b16 %v704, %v703
    %v718 = vpack.c.b16 %v706, %v705
    %v719 = vpack.c.b16 %v708, %v707
    %v720 = vpack.c.b16 %v710, %v709
    %v721 = vpack.c.b16 %v712, %v711
    %v722 = vpack.c.b16 %v714, %v713
    %731 = vmatpush.bf16.msra.mxu0 %v722
    %732 = vmatpush.bf16.msra.mxu0 %v721
    %733 = vmatpush.bf16.msra.mxu0 %v720
    %734 = vmatpush.bf16.msra.mxu0 %v719
    %735 = vmatpush.bf16.msra.mxu0 %v718
    %736 = vmatpush.bf16.msra.mxu0 %v717
    %737 = vmatpush.bf16.msra.mxu0 %v716
    %738 = vmatpush.bf16.msra.mxu0 %v715
    %739 = vmatmul.bf16.gmra.mxu0 %v663
    %v740 = vpop.f32.mrf.mxu0
    %v741 = vadd.f32 %v681, %v740
    %v742 = vpop.f32.mrf.mxu0
    %743 = vdwg.mxu0
    %v744 = vmax.f32 %v741, 0.0
    %v745 = vld [vmem:[%s8 + $0x7] sm:$0x3]
    %v746 = vpack.c.bf16 %v744, %v744
    %v747 = vld [vmem:[%s6] sm:$0xff]
    %v748 = vld [vmem:[%s6 + $0x8] sm:$0xff]
    %v749 = vld [vmem:[%s6 + $0x10] sm:$0xff]
    %v750 = vld [vmem:[%s6 + $0x18] sm:$0xff]
    %v751 = vld [vmem:[%s6 + $0x20] sm:$0xff]
    %v752 = vld [vmem:[%s6 + $0x28] sm:$0xff]
    %v753 = vld [vmem:[%s6 + $0x30] sm:$0xff]
    %v754 = vld [vmem:[%s6 + $0x38] sm:$0xff]
    %v755 = vld [vmem:[%s6 + $0x40] sm:$0xff]
    %v756 = vld [vmem:[%s6 + $0x48] sm:$0xff]
    %v757 = vld [vmem:[%s6 + $0x50] sm:$0xff]
    %v758 = vld [vmem:[%s6 + $0x58] sm:$0xff]
    %v759 = vld [vmem:[%s6 + $0x60] sm:$0xff]
    %v760 = vld [vmem:[%s6 + $0x68] sm:$0xff]
    %v761 = vld [vmem:[%s6 + $0x70] sm:$0xff]
    %v762 = vld [vmem:[%s6 + $0x78] sm:$0xff]
    %v764 = vperm.slane %v745, 0
    %v765 = vperm.slane %v745, 1
    %v784 = vunpack.c.l.b16 %v747
    %v785 = vunpack.c.h.b16 %v747
    %v786 = vunpack.c.l.b16 %v748
    %v787 = vunpack.c.h.b16 %v748
    %v788 = vunpack.c.l.b16 %v749
    %v789 = vunpack.c.h.b16 %v749
    %v790 = vunpack.c.l.b16 %v750
    %v791 = vunpack.c.h.b16 %v750
    %v792 = vunpack.c.l.b16 %v751
    %v793 = vunpack.c.h.b16 %v751
    %v794 = vunpack.c.l.b16 %v752
    %v795 = vunpack.c.h.b16 %v752
    %v796 = vunpack.c.l.b16 %v753
    %v797 = vunpack.c.h.b16 %v753
    %v798 = vunpack.c.l.b16 %v754
    %v799 = vunpack.c.h.b16 %v754
    %v800 = vunpack.c.l.b16 %v755
    %v801 = vunpack.c.h.b16 %v755
    %v802 = vunpack.c.l.b16 %v756
    %v803 = vunpack.c.h.b16 %v756
    %v804 = vunpack.c.l.b16 %v757
    %v805 = vunpack.c.h.b16 %v757
    %v806 = vunpack.c.l.b16 %v758
    %v807 = vunpack.c.h.b16 %v758
    %v808 = vunpack.c.l.b16 %v759
    %v809 = vunpack.c.h.b16 %v759
    %v810 = vunpack.c.l.b16 %v760
    %v811 = vunpack.c.h.b16 %v760
    %v812 = vunpack.c.l.b16 %v761
    %v813 = vunpack.c.h.b16 %v761
    %v814 = vunpack.c.l.b16 %v762
    %v815 = vunpack.c.h.b16 %v762
    %v816 = vpack.c.b16 %v786, %v784
    %v817 = vpack.c.b16 %v787, %v785
    %v818 = vpack.c.b16 %v790, %v788
    %v819 = vpack.c.b16 %v791, %v789
    %v820 = vpack.c.b16 %v794, %v792
    %v821 = vpack.c.b16 %v795, %v793
    %v822 = vpack.c.b16 %v798, %v796
    %v823 = vpack.c.b16 %v799, %v797
    %v824 = vpack.c.b16 %v802, %v800
    %v825 = vpack.c.b16 %v803, %v801
    %v826 = vpack.c.b16 %v806, %v804
    %v827 = vpack.c.b16 %v807, %v805
    %v828 = vpack.c.b16 %v810, %v808
    %v829 = vpack.c.b16 %v811, %v809
    %v830 = vpack.c.b16 %v814, %v812
    %v831 = vpack.c.b16 %v815, %v813
    %848 = vmatpush.bf16.msra.mxu0 %v830
    %849 = vmatpush.bf16.msra.mxu0 %v828
    %850 = vmatpush.bf16.msra.mxu0 %v826
    %851 = vmatpush.bf16.msra.mxu0 %v824
    %852 = vmatpush.bf16.msra.mxu0 %v822
    %853 = vmatpush.bf16.msra.mxu0 %v820
    %854 = vmatpush.bf16.msra.mxu0 %v818
    %855 = vmatpush.bf16.msra.mxu0 %v816
    %856 = vmatmul.bf16.gmra.mxu0 %v746
    %v857 = vpop.f32.mrf.mxu0
    %v858 = vadd.f32 %v764, %v857
    %v859 = vpop.f32.mrf.mxu0
    %860 = vdwg.mxu0
    %861 = vmatpush.bf16.msra.mxu0 %v831
    %862 = vmatpush.bf16.msra.mxu0 %v829
    %863 = vmatpush.bf16.msra.mxu0 %v827
    %864 = vmatpush.bf16.msra.mxu0 %v825
    %865 = vmatpush.bf16.msra.mxu0 %v823
    %866 = vmatpush.bf16.msra.mxu0 %v821
    %867 = vmatpush.bf16.msra.mxu0 %v819
    %868 = vmatpush.bf16.msra.mxu0 %v817
    %869 = vmatmul.bf16.gmra.mxu0 %v746
    %v870 = vpop.f32.mrf.mxu0
    %v871 = vadd.f32 %v765, %v870
    %v872 = vpop.f32.mrf.mxu0
    %873 = vdwg.mxu0
    %v874 = vmax.f32 %v858, 0.0
    %v875 = vmax.f32 %v871, 0.0
    %v876 = vld [vmem:[%s8 + $0x9] sm:$0x1]
    %v877 = vpack.c.bf16 %v874, %v874
    %v878 = vpack.c.bf16 %v875, %v875
    %v879 = vld [vmem:[%s7] sm:$0xf]
    %v880 = vld [vmem:[%s7 + $0x4] sm:$0xf]
    %v881 = vld [vmem:[%s7 + $0x8] sm:$0xf]
    %v882 = vld [vmem:[%s7 + $0xc] sm:$0xf]
    %v883 = vld [vmem:[%s7 + $0x10] sm:$0xf]
    %v884 = vld [vmem:[%s7 + $0x14] sm:$0xf]
    %v885 = vld [vmem:[%s7 + $0x18] sm:$0xf]
    %v886 = vld [vmem:[%s7 + $0x1c] sm:$0xf]
    %v887 = vld [vmem:[%s7 + $0x20] sm:$0xf]
    %v888 = vld [vmem:[%s7 + $0x24] sm:$0xf]
    %v889 = vld [vmem:[%s7 + $0x28] sm:$0xf]
    %v890 = vld [vmem:[%s7 + $0x2c] sm:$0xf]
    %v891 = vld [vmem:[%s7 + $0x30] sm:$0xf]
    %v892 = vld [vmem:[%s7 + $0x34] sm:$0xf]
    %v893 = vld [vmem:[%s7 + $0x38] sm:$0xf]
    %v894 = vld [vmem:[%s7 + $0x3c] sm:$0xf]
    %v895 = vld [vmem:[%s7 + $0x40] sm:$0xf]
    %v896 = vld [vmem:[%s7 + $0x44] sm:$0xf]
    %v897 = vld [vmem:[%s7 + $0x48] sm:$0xf]
    %v898 = vld [vmem:[%s7 + $0x4c] sm:$0xf]
    %v899 = vld [vmem:[%s7 + $0x50] sm:$0xf]
    %v900 = vld [vmem:[%s7 + $0x54] sm:$0xf]
    %v901 = vld [vmem:[%s7 + $0x58] sm:$0xf]
    %v902 = vld [vmem:[%s7 + $0x5c] sm:$0xf]
    %v903 = vld [vmem:[%s7 + $0x60] sm:$0xf]
    %v904 = vld [vmem:[%s7 + $0x64] sm:$0xf]
    %v905 = vld [vmem:[%s7 + $0x68] sm:$0xf]
    %v906 = vld [vmem:[%s7 + $0x6c] sm:$0xf]
    %v907 = vld [vmem:[%s7 + $0x70] sm:$0xf]
    %v908 = vld [vmem:[%s7 + $0x74] sm:$0xf]
    %v909 = vld [vmem:[%s7 + $0x78] sm:$0xf]
    %v910 = vld [vmem:[%s7 + $0x7c] sm:$0xf]
    %v912 = vperm.slane %v876, 0
    %v946 = vunpack.c.l.b16 %v879
    %v947 = vunpack.c.l.b16 %v880
    %v948 = vunpack.c.l.b16 %v881
    %v949 = vunpack.c.l.b16 %v882
    %v950 = vunpack.c.l.b16 %v883
    %v951 = vunpack.c.l.b16 %v884
    %v952 = vunpack.c.l.b16 %v885
    %v953 = vunpack.c.l.b16 %v886
    %v954 = vunpack.c.l.b16 %v887
    %v955 = vunpack.c.l.b16 %v888
    %v956 = vunpack.c.l.b16 %v889
    %v957 = vunpack.c.l.b16 %v890
    %v958 = vunpack.c.l.b16 %v891
    %v959 = vunpack.c.l.b16 %v892
    %v960 = vunpack.c.l.b16 %v893
    %v961 = vunpack.c.l.b16 %v894
    %v962 = vunpack.c.l.b16 %v895
    %v963 = vunpack.c.l.b16 %v896
    %v964 = vunpack.c.l.b16 %v897
    %v965 = vunpack.c.l.b16 %v898
    %v966 = vunpack.c.l.b16 %v899
    %v967 = vunpack.c.l.b16 %v900
    %v968 = vunpack.c.l.b16 %v901
    %v969 = vunpack.c.l.b16 %v902
    %v970 = vunpack.c.l.b16 %v903
    %v971 = vunpack.c.l.b16 %v904
    %v972 = vunpack.c.l.b16 %v905
    %v973 = vunpack.c.l.b16 %v906
    %v974 = vunpack.c.l.b16 %v907
    %v975 = vunpack.c.l.b16 %v908
    %v976 = vunpack.c.l.b16 %v909
    %v977 = vunpack.c.l.b16 %v910
    %v978 = vpack.c.b16 %v947, %v946
    %v979 = vpack.c.b16 %v949, %v948
    %v980 = vpack.c.b16 %v951, %v950
    %v981 = vpack.c.b16 %v953, %v952
    %v982 = vpack.c.b16 %v955, %v954
    %v983 = vpack.c.b16 %v957, %v956
    %v984 = vpack.c.b16 %v959, %v958
    %v985 = vpack.c.b16 %v961, %v960
    %v986 = vpack.c.b16 %v963, %v962
    %v987 = vpack.c.b16 %v965, %v964
    %v988 = vpack.c.b16 %v967, %v966
    %v989 = vpack.c.b16 %v969, %v968
    %v990 = vpack.c.b16 %v971, %v970
    %v991 = vpack.c.b16 %v973, %v972
    %v992 = vpack.c.b16 %v975, %v974
    %v993 = vpack.c.b16 %v977, %v976
    %1010 = vmatpush.bf16.msra.mxu0 %v985
    %1011 = vmatpush.bf16.msra.mxu0 %v984
    %1012 = vmatpush.bf16.msra.mxu0 %v983
    %1013 = vmatpush.bf16.msra.mxu0 %v982
    %1014 = vmatpush.bf16.msra.mxu0 %v981
    %1015 = vmatpush.bf16.msra.mxu0 %v980
    %1016 = vmatpush.bf16.msra.mxu0 %v979
    %1017 = vmatpush.bf16.msra.mxu0 %v978
    %1018 = vmatmul.bf16.gmra.mxu0 %v877
    %v1019 = vpop.f32.mrf.mxu0
    %v1020 = vadd.f32 %v912, %v1019
    %v1021 = vpop.f32.mrf.mxu0
    %1022 = vdwg.mxu0
    %1023 = vmatpush.bf16.msra.mxu0 %v993
    %1024 = vmatpush.bf16.msra.mxu0 %v992
    %1025 = vmatpush.bf16.msra.mxu0 %v991
    %1026 = vmatpush.bf16.msra.mxu0 %v990
    %1027 = vmatpush.bf16.msra.mxu0 %v989
    %1028 = vmatpush.bf16.msra.mxu0 %v988
    %1029 = vmatpush.bf16.msra.mxu0 %v987
    %1030 = vmatpush.bf16.msra.mxu0 %v986
    %1031 = vmatmul.bf16.gmra.mxu0 %v878
    %v1032 = vpop.f32.mrf.mxu0
    %v1033 = vadd.f32 %v1020, %v1032
    %v1034 = vpop.f32.mrf.mxu0
    %1035 = vdwg.mxu0
    %v1036 = vlaneseq
    %v1037 = vand.u32 %v1036, 127
    %vm1038 = vcmp.lt.s32.totalorder %v1037, 10
    %v1039 = vsel %vm1038, %v1033, -1e+30
    %1040 = vmax.xlane.f32.xlu0 %v1039
    %v1041 = vpop.xlane.xlu0 %1040
    %v1042 = vsub.f32 %v1039, %v1041
    %v1043 = vmul.f32 %v1042, 1.442695
    %v1044 = vpow.pop %v1043
    %1045 = vadd.xlane.f32.xlu0 %v1044
    %v1046 = vpop.xlane.xlu0 %1045
    %v1047 = vrcp.pop %v1046
    %v1048 = vmul.f32 %v1044, %v1047
    %1049 = vst [vmem:[#allocation2] sm:$0xff] %v1048
    // Predicated region
    $region38: #{mlp_forward.1} parent=1 // pred_check
      _
    $region39: #{mlp_forward.1} parent=1 // pred_check_branch
      %1051 = sbr.rel (0) target = $region41
    $region40: #{mlp_forward.1} parent=1 // pred_region
      %1053 = vsyncadd [#allocation3], 0
      %s1055 = sshll.u32 [#allocation2], 4
      %s1056 = int_to_ptr.vmem [resolvable:$true] %s1055
      %s1057 = sshll.u32 %s9, 4
      %s1058 = int_to_ptr.hbm [resolvable:$true] %s1057
      %1060 = dma.vmem_to_hbm [thread:$0]  %s1056, 128, %s1058, [#allocation3]
    $region41: #{mlp_forward.1} parent=1 // pred_fallthru
      _
    // Predicated region
    $region42: #{mlp_forward.1} parent=1 // pred_check
      _
    $region43: #{mlp_forward.1} parent=1 // pred_check_branch
      %1062 = sbr.rel (0) target = $region45
    $region44: #{mlp_forward.1} parent=1 // pred_region
      %1064 = dma.done [#allocation3], 128
    $region45: #{mlp_forward.1} parent=1 // pred_fallthru
      _
    %1065 = vsyncpa [#allocation3], 1

</llo_original>
